<compile_context>
chip_gen: v6e
topology: v6e:2x2x1
jax: 0.10.0
libtpu: 0.0.40
codegen_flags: <defaults>
</compile_context>

<pallas_src>
import functools

import jax
import jax.numpy as jnp
from jax.experimental import pallas as pl
from jax.experimental.pallas import tpu as pltpu

LANE = 128          # TPU lane width: hidden/action feature dims padded to this.
BATCH_ALIGN = 16    # bf16 sublane packing: batch tiles are multiples of 16 rows.
TM_MAX = 2048       # max batch-tile rows per grid step (working set ~3 MB, far
                    # under every generation's scoped VMEM).
N_SUB = 4           # intra-tile row sub-tiles for MXU/epilogue overlap.


def _cdiv(a, b):
    return -(-a // b)


def _round_up(n, m):
    return _cdiv(n, m) * m


def _pad_to(a, shape):
    return jnp.pad(a, [(0, t - s) for s, t in zip(a.shape, shape)])


def _dqn_kernel(x_ref, w1_ref, b1_ref, w2_ref, b2_ref, w3_ref, b3_ref, out_ref,
                *, n_sub, sub_rows):
    # Weights/biases are VMEM-resident (constant index_map); load once.
    w1 = w1_ref[...]
    w2 = w2_ref[...]
    w3 = w3_ref[...]
    b1 = b1_ref[...]
    b2 = b2_ref[...]
    b3 = b3_ref[...]

    # Static unrolled sub-tiles: independent row groups so sub-tile i's f32
    # bias-add/ReLU/bf16-cast epilogue overlaps sub-tile i+1's vmatmul pushes.
    for s in range(n_sub):
        rows = pl.ds(s * sub_rows, sub_rows)
        x = x_ref[rows, :]
        # fc1 + ReLU  (bf16 operands on the MXU, f32 accumulate, f32 epilogue)
        h1 = jnp.dot(x, w1, preferred_element_type=jnp.float32)
        h1 = jnp.maximum(h1 + b1, 0.0)
        # fc2 + ReLU
        h2 = jnp.dot(h1.astype(jnp.bfloat16), w2,
                     preferred_element_type=jnp.float32)
        h2 = jnp.maximum(h2 + b2, 0.0)
        # fc3 (no activation); padded output lanes stay exactly zero.
        q = jnp.dot(h2.astype(jnp.bfloat16), w3,
                    preferred_element_type=jnp.float32)
        out_ref[rows, :] = (q + b3).astype(out_ref.dtype)


def prepare_params(params):
    """One-time pack: pad hidden/action dims to 128 lanes and cast weights to
    bf16 (MXU operand format). Biases stay f32 (f32 epilogue). Do NOT call this
    per forward step - that's per-call wrapper work the kernel can't hide."""
    w1, b1 = params["w1"], params["b1"]
    w2, b2 = params["w2"], params["b2"]
    w3, b3 = params["w3"], params["b3"]
    S, H = w1.shape
    A = w3.shape[1]
    H_pad = _round_up(H, LANE)
    A_pad = _round_up(A, LANE)
    packed = dict(
        w1=_pad_to(w1, (S, H_pad)).astype(jnp.bfloat16),
        w2=_pad_to(w2, (H_pad, H_pad)).astype(jnp.bfloat16),
        w3=_pad_to(w3, (H_pad, A_pad)).astype(jnp.bfloat16),
        b1=_pad_to(b1, (1, H_pad)).astype(jnp.float32),
        b2=_pad_to(b2, (1, H_pad)).astype(jnp.float32),
        b3=_pad_to(b3, (1, A_pad)).astype(jnp.float32),
    )
    return packed, A


@functools.partial(jax.jit, static_argnames=("action_size",))
def dqn_forward(x, packed, action_size):
    """x: (B, state_size) float32. packed: output of prepare_params."""
    w1, b1 = packed["w1"], packed["b1"]
    w2, b2 = packed["w2"], packed["b2"]
    w3, b3 = packed["w3"], packed["b3"]

    B, S = x.shape
    H_pad = w1.shape[1]
    A_pad = w3.shape[1]

    # --- batch tiling ------------------------------------------------------
    # Distribute B over the minimum number of tiles (amortize ~0.35us/step),
    # but force >=2 steps when possible so v7x's two TCs both get work.
    n_tiles = _cdiv(B, TM_MAX)
    if B >= 2 * BATCH_ALIGN:
        n_tiles = max(n_tiles, 2)
    raw = _cdiv(B, n_tiles)
    if raw >= N_SUB * BATCH_ALIGN:
        n_sub = N_SUB
        TM = _round_up(raw, N_SUB * BATCH_ALIGN)
    else:
        n_sub = 1
        TM = _round_up(raw, BATCH_ALIGN)
    B_pad = n_tiles * TM

    # Zero-padding is exact for Linear+ReLU; padded rows are sliced off below.
    x_p = _pad_to(x, (B_pad, S)).astype(jnp.bfloat16)

    # Weights/biases: constant index_map -> fetched once, VMEM-resident.
    resident = lambda shape: pl.BlockSpec(shape, lambda i: (0, 0))

    flops = 2 * B_pad * (S * H_pad + H_pad * H_pad + H_pad * A_pad)
    bytes_accessed = (
        x_p.size * 2                                    # bf16 input tiles
        + (w1.size + w2.size + w3.size) * 2             # bf16 weights (once)
        + (b1.size + b2.size + b3.size) * 4             # f32 biases (once)
        + B_pad * A_pad * 2                             # bf16 padded output
    )

    out = pl.pallas_call(
        functools.partial(_dqn_kernel, n_sub=n_sub, sub_rows=TM // n_sub),
        out_shape=jax.ShapeDtypeStruct((B_pad, A_pad), jnp.bfloat16),
        grid=(n_tiles,),
        in_specs=[
            pl.BlockSpec((TM, S), lambda i: (i, 0)),           # x (streamed)
            resident((S, H_pad)), resident((1, H_pad)),        # fc1
            resident((H_pad, H_pad)), resident((1, H_pad)),    # fc2
            resident((H_pad, A_pad)), resident((1, A_pad)),    # fc3
        ],
        out_specs=pl.BlockSpec((TM, A_pad), lambda i: (i, 0)),  # lane-dense out
        compiler_params=pltpu.CompilerParams(
            dimension_semantics=("parallel",),  # shard batch tiles across TCs
        ),
        cost_estimate=pl.CostEstimate(
            flops=flops, transcendentals=0, bytes_accessed=bytes_accessed),
    )(x_p, w1, b1, w2, b2, w3, b3)

    # Keep the slice here: consuming the padded slab directly (e.g. argmax)
    # would let the zero padding lanes win over all-negative Q-values.
    return out[:B, :action_size].astype(jnp.float32)


def init_dqn_params(key, state_size, action_size, hidden=64):
    """Deterministic init mimicking PyTorch's default Linear init
    (uniform(-1/sqrt(fan_in), 1/sqrt(fan_in)))."""
    def linear(key, fan_in, fan_out):
        kw, kb = jax.random.split(key)
        bound = 1.0 / jnp.sqrt(fan_in)
        w = jax.random.uniform(kw, (fan_in, fan_out), jnp.float32, -bound, bound)
        b = jax.random.uniform(kb, (1, fan_out), jnp.float32, -bound, bound)
        return w, b

    k1, k2, k3 = jax.random.split(key, 3)
    w1, b1 = linear(k1, state_size, hidden)
    w2, b2 = linear(k2, hidden, hidden)
    w3, b3 = linear(k3, hidden, action_size)
    return dict(w1=w1, b1=b1, w2=w2, b2=b2, w3=w3, b3=b3)


def dqn_reference(x, p):
    h1 = jnp.maximum(x @ p["w1"] + p["b1"], 0.0)
    h2 = jnp.maximum(h1 @ p["w2"] + p["b2"], 0.0)
    return h2 @ p["w3"] + p["b3"]


if __name__ == "__main__":
    key = jax.random.PRNGKey(0)
    k_params, k_x = jax.random.split(key)

    batch = 8
    state_size = 16
    action_size = 4

    params = init_dqn_params(k_params, state_size, action_size)
    packed, act = prepare_params(params)          # one-time weight pack
    x = jax.random.normal(k_x, (batch, state_size), jnp.float32)

    out = dqn_forward(x, packed, action_size=act)
    out = jax.block_until_ready(out)

    ref = dqn_reference(x, params)  # f32 reference
    assert out.shape == (batch, action_size)
    max_err = float(jnp.max(jnp.abs(out - ref)))
    # bf16 weights/activations/output with f32 accumulation -> loosened tolerance.
    assert jnp.allclose(out, ref, atol=3e-2, rtol=3e-2), (
        f"mismatch vs reference, max |err|={max_err}"
    )

    print("KERNEL_OK")
</pallas_src>

<mosaic_0001>
module attributes {stable_mosaic.version = 11 : i64} {
  func.func @_dqn_kernel(%arg0: i32, %arg1: memref<16x16xbf16, #tpu.memory_space<vmem>>, %arg2: memref<16x128xbf16, #tpu.memory_space<vmem>>, %arg3: memref<1x128xf32, #tpu.memory_space<vmem>>, %arg4: memref<128x128xbf16, #tpu.memory_space<vmem>>, %arg5: memref<1x128xf32, #tpu.memory_space<vmem>>, %arg6: memref<128x128xbf16, #tpu.memory_space<vmem>>, %arg7: memref<1x128xf32, #tpu.memory_space<vmem>>, %arg8: memref<16x128xbf16, #tpu.memory_space<vmem>>) attributes {dimension_semantics = [#tpu.dimension_semantics<parallel>], iteration_bounds = array<i64: 1>, scalar_prefetch = 0 : i64, scratch_operands = 0 : i64, tpu.core_type = #tpu.core_type<tc>, window_params = [{transform_indices = @transform_0, window_bounds = array<i64: 16, 16>}, {pipeline_mode = #tpu.pipeline_mode<synchronous>, transform_indices = @transform_1, window_bounds = array<i64: 16, 128>}, {pipeline_mode = #tpu.pipeline_mode<synchronous>, transform_indices = @transform_2, window_bounds = array<i64: 1, 128>}, {pipeline_mode = #tpu.pipeline_mode<synchronous>, transform_indices = @transform_3, window_bounds = array<i64: 128, 128>}, {pipeline_mode = #tpu.pipeline_mode<synchronous>, transform_indices = @transform_4, window_bounds = array<i64: 1, 128>}, {pipeline_mode = #tpu.pipeline_mode<synchronous>, transform_indices = @transform_5, window_bounds = array<i64: 128, 128>}, {pipeline_mode = #tpu.pipeline_mode<synchronous>, transform_indices = @transform_6, window_bounds = array<i64: 1, 128>}, {transform_indices = @transform_7, window_bounds = array<i64: 16, 128>}]} {
    %c0 = arith.constant 0 : index
    %c0_0 = arith.constant 0 : index
    %0 = vector.load %arg2[%c0, %c0_0] : memref<16x128xbf16, #tpu.memory_space<vmem>>, vector<16x128xbf16>
    %c0_1 = arith.constant 0 : index
    %c0_2 = arith.constant 0 : index
    %1 = vector.load %arg4[%c0_1, %c0_2] : memref<128x128xbf16, #tpu.memory_space<vmem>>, vector<128x128xbf16>
    %c0_3 = arith.constant 0 : index
    %c0_4 = arith.constant 0 : index
    %2 = vector.load %arg6[%c0_3, %c0_4] : memref<128x128xbf16, #tpu.memory_space<vmem>>, vector<128x128xbf16>
    %c0_5 = arith.constant 0 : index
    %c0_6 = arith.constant 0 : index
    %3 = vector.load %arg3[%c0_5, %c0_6] : memref<1x128xf32, #tpu.memory_space<vmem>>, vector<1x128xf32>
    %c0_7 = arith.constant 0 : index
    %c0_8 = arith.constant 0 : index
    %4 = vector.load %arg5[%c0_7, %c0_8] : memref<1x128xf32, #tpu.memory_space<vmem>>, vector<1x128xf32>
    %c0_9 = arith.constant 0 : index
    %c0_10 = arith.constant 0 : index
    %5 = vector.load %arg7[%c0_9, %c0_10] : memref<1x128xf32, #tpu.memory_space<vmem>>, vector<1x128xf32>
    %c0_11 = arith.constant 0 : index
    %c0_12 = arith.constant 0 : index
    %6 = vector.load %arg1[%c0_11, %c0_12] : memref<16x16xbf16, #tpu.memory_space<vmem>>, vector<16x16xbf16>
    %cst = arith.constant dense<0.000000e+00> : vector<16x128xf32>
    %7 = tpu.matmul %6, %0, %cst {dimension_numbers = #tpu.dot_dimension_numbers<[1], [0], [0], [1], [0, 0, 1, 1], [], []>} : vector<16x16xbf16>, vector<16x128xbf16>, vector<16x128xf32> -> vector<16x128xf32>
    %8 = vector.broadcast %3 : vector<1x128xf32> to vector<16x128xf32>
    %9 = arith.addf %7, %8 : vector<16x128xf32>
    %cst_13 = arith.constant 0.000000e+00 : f32
    %10 = vector.broadcast %cst_13 : f32 to vector<16x128xf32>
    %11 = arith.maximumf %9, %10 : vector<16x128xf32>
    %12 = arith.truncf %11 : vector<16x128xf32> to vector<16x128xbf16>
    %cst_14 = arith.constant dense<0.000000e+00> : vector<16x128xf32>
    %13 = tpu.matmul %12, %1, %cst_14 {dimension_numbers = #tpu.dot_dimension_numbers<[1], [0], [0], [1], [0, 0, 1, 1], [], []>} : vector<16x128xbf16>, vector<128x128xbf16>, vector<16x128xf32> -> vector<16x128xf32>
    %14 = vector.broadcast %4 : vector<1x128xf32> to vector<16x128xf32>
    %15 = arith.addf %13, %14 : vector<16x128xf32>
    %cst_15 = arith.constant 0.000000e+00 : f32
    %16 = vector.broadcast %cst_15 : f32 to vector<16x128xf32>
    %17 = arith.maximumf %15, %16 : vector<16x128xf32>
    %18 = arith.truncf %17 : vector<16x128xf32> to vector<16x128xbf16>
    %cst_16 = arith.constant dense<0.000000e+00> : vector<16x128xf32>
    %19 = tpu.matmul %18, %2, %cst_16 {dimension_numbers = #tpu.dot_dimension_numbers<[1], [0], [0], [1], [0, 0, 1, 1], [], []>} : vector<16x128xbf16>, vector<128x128xbf16>, vector<16x128xf32> -> vector<16x128xf32>
    %20 = vector.broadcast %5 : vector<1x128xf32> to vector<16x128xf32>
    %21 = arith.addf %19, %20 : vector<16x128xf32>
    %22 = arith.truncf %21 : vector<16x128xf32> to vector<16x128xbf16>
    %c0_17 = arith.constant 0 : index
    %c0_18 = arith.constant 0 : index
    %23 = vector.load %arg8[%c0_17, %c0_18] : memref<16x128xbf16, #tpu.memory_space<vmem>>, vector<16x128xbf16>
    tpu.vector_store %arg8[%c0_17, %c0_18], %22 {strides = array<i32>} : memref<16x128xbf16, #tpu.memory_space<vmem>>, vector<16x128xbf16>,
    return
  }
  func.func @transform_0(%arg0: i32) -> (i32, i32) {
    %c0_i32 = arith.constant 0 : i32
    %c0_i32_0 = arith.constant 0 : i32
    return %arg0, %c0_i32 : i32, i32
  }
  func.func @transform_1(%arg0: i32) -> (i32, i32) {
    %c0_i32 = arith.constant 0 : i32
    %c0_i32_0 = arith.constant 0 : i32
    %c0_i32_1 = arith.constant 0 : i32
    return %c0_i32, %c0_i32_0 : i32, i32
  }
  func.func @transform_2(%arg0: i32) -> (i32, i32) {
    %c0_i32 = arith.constant 0 : i32
    %c0_i32_0 = arith.constant 0 : i32
    %c0_i32_1 = arith.constant 0 : i32
    return %c0_i32, %c0_i32_0 : i32, i32
  }
  func.func @transform_3(%arg0: i32) -> (i32, i32) {
    %c0_i32 = arith.constant 0 : i32
    %c0_i32_0 = arith.constant 0 : i32
    %c0_i32_1 = arith.constant 0 : i32
    return %c0_i32, %c0_i32_0 : i32, i32
  }
  func.func @transform_4(%arg0: i32) -> (i32, i32) {
    %c0_i32 = arith.constant 0 : i32
    %c0_i32_0 = arith.constant 0 : i32
    %c0_i32_1 = arith.constant 0 : i32
    return %c0_i32, %c0_i32_0 : i32, i32
  }
  func.func @transform_5(%arg0: i32) -> (i32, i32) {
    %c0_i32 = arith.constant 0 : i32
    %c0_i32_0 = arith.constant 0 : i32
    %c0_i32_1 = arith.constant 0 : i32
    return %c0_i32, %c0_i32_0 : i32, i32
  }
  func.func @transform_6(%arg0: i32) -> (i32, i32) {
    %c0_i32 = arith.constant 0 : i32
    %c0_i32_0 = arith.constant 0 : i32
    %c0_i32_1 = arith.constant 0 : i32
    return %c0_i32, %c0_i32_0 : i32, i32
  }
  func.func @transform_7(%arg0: i32) -> (i32, i32) {
    %c0_i32 = arith.constant 0 : i32
    %c0_i32_0 = arith.constant 0 : i32
    return %arg0, %c0_i32 : i32, i32
  }
}

</mosaic_0001>

<llo_original>
// kernel: dqn_forward.1
$region0: #{dqn_forward.1}
  #allocation0 [shape = 'u32[]', space=smem, size = 0x4, offset = 0x4, fixed_abs, tag = 'smem constant byte address 0x4 - core index']
  #allocation1 [shape = 'u32[144,128]{1,0:T(1,128)}', space=vmem, size = 0x12000, scoped, tag = 'internal scratch']
  %s0 = inlined_call_operand.vmem [shape: bf16[16,16], index: 0, kind: input, shape index: {}]
  %s1 = inlined_call_operand.vmem [shape: bf16[16,128], index: 1, kind: input, shape index: {}]
  %s2 = inlined_call_operand.vmem [shape: f32[1,128], index: 2, kind: input, shape index: {}]
  %s3 = inlined_call_operand.hbm [shape: bf16[128,128], index: 3, kind: input, shape index: {}]
  %s4 = inlined_call_operand.vmem [shape: f32[1,128], index: 4, kind: input, shape index: {}]
  %s5 = inlined_call_operand.hbm [shape: bf16[128,128], index: 5, kind: input, shape index: {}]
  %s6 = inlined_call_operand.vmem [shape: f32[1,128], index: 6, kind: input, shape index: {}]
  %s7 = inlined_call_operand.vmem [shape: bf16[16,128], index: 7, kind: output, shape index: {}]
  %s8 = sld [smem:[#allocation0]]
  $region46: #{dqn_forward.1} parent=0
    _
  %s10 = ssub.s32 1, %s8
  %s11 = scalar_select 0, %s10, %s8
  $region1: #{dqn_forward.1} parent=0
    #allocation2 [shape = 'u8[32768]{0}', space=vmem, size = 0x8000, scoped, tag = 'input window, operand 3, single buffered']
    #allocation3 [shape = 's32[1]{0}', space=sflag, size = 0x4, scoped, tag = 'scoped memory for dqn_forward.1']
    #allocation4 [shape = 'u8[32768]{0}', space=vmem, size = 0x8000, scoped, tag = 'input window, operand 5, single buffered']
    #allocation5 [shape = 's32[1]{0}', space=sflag, size = 0x4, scoped, tag = 'scoped memory for dqn_forward.1']
    %12 = vsyncpa [#allocation3], 0
    %13 = vsyncpa [#allocation5], 0
    // Predicated region
    $region2: #{dqn_forward.1} parent=1 // pred_check
      _
    $region3: #{dqn_forward.1} parent=1 // pred_check_branch
      %15 = sbr.rel (0) target = $region5
    $region4: #{dqn_forward.1} parent=1 // pred_region
      _
    $region5: #{dqn_forward.1} parent=1 // pred_fallthru
      _
    // Predicated region
    $region6: #{dqn_forward.1} parent=1 // pred_check
      _
    $region7: #{dqn_forward.1} parent=1 // pred_check_branch
      %17 = sbr.rel (0) target = $region9
    $region8: #{dqn_forward.1} parent=1 // pred_region
      _
    $region9: #{dqn_forward.1} parent=1 // pred_fallthru
      _
    // Predicated region
    $region10: #{dqn_forward.1} parent=1 // pred_check
      _
    $region11: #{dqn_forward.1} parent=1 // pred_check_branch
      %19 = sbr.rel (0) target = $region13
    $region12: #{dqn_forward.1} parent=1 // pred_region
      _
    $region13: #{dqn_forward.1} parent=1 // pred_fallthru
      _
    // Predicated region
    $region14: #{dqn_forward.1} parent=1 // pred_check
      _
    $region15: #{dqn_forward.1} parent=1 // pred_check_branch
      %21 = sbr.rel (0) target = $region17
    $region16: #{dqn_forward.1} parent=1 // pred_region
      %s23 = ssub.s32 1024, 1024
      %24 = vsyncadd [#allocation3], %s23
      %s25 = sshll.u32 [#allocation2], 4
      %s26 = int_to_ptr.vmem [resolvable:$true] %s25
      %31 = dma.hbm_to_vmem [thread:$0]  %s3, 1024, %s26, [#allocation3], 64, 64, 4
    $region17: #{dqn_forward.1} parent=1 // pred_fallthru
      _
    // Predicated region
    $region18: #{dqn_forward.1} parent=1 // pred_check
      _
    $region19: #{dqn_forward.1} parent=1 // pred_check_branch
      %33 = sbr.rel (0) target = $region21
    $region20: #{dqn_forward.1} parent=1 // pred_region
      _
    $region21: #{dqn_forward.1} parent=1 // pred_fallthru
      _
    // Predicated region
    $region22: #{dqn_forward.1} parent=1 // pred_check
      _
    $region23: #{dqn_forward.1} parent=1 // pred_check_branch
      %35 = sbr.rel (0) target = $region25
    $region24: #{dqn_forward.1} parent=1 // pred_region
      %s37 = ssub.s32 1024, 1024
      %38 = vsyncadd [#allocation5], %s37
      %s39 = sshll.u32 [#allocation4], 4
      %s40 = int_to_ptr.vmem [resolvable:$true] %s39
      %45 = dma.hbm_to_vmem [thread:$0]  %s5, 1024, %s40, [#allocation5], 64, 64, 4
    $region25: #{dqn_forward.1} parent=1 // pred_fallthru
      _
    // Predicated region
    $region26: #{dqn_forward.1} parent=1 // pred_check
      _
    $region27: #{dqn_forward.1} parent=1 // pred_check_branch
      %47 = sbr.rel (0) target = $region29
    $region28: #{dqn_forward.1} parent=1 // pred_region
      _
    $region29: #{dqn_forward.1} parent=1 // pred_fallthru
      _
    // Predicated region
    $region30: #{dqn_forward.1} parent=1 // pred_check
      _
    $region31: #{dqn_forward.1} parent=1 // pred_check_branch
      %49 = sbr.rel (0) target = $region33
    $region32: #{dqn_forward.1} parent=1 // pred_region
      %50 = dma.done [#allocation3], 1024
    $region33: #{dqn_forward.1} parent=1 // pred_fallthru
      _
    // Predicated region
    $region34: #{dqn_forward.1} parent=1 // pred_check
      _
    $region35: #{dqn_forward.1} parent=1 // pred_check_branch
      %52 = sbr.rel (0) target = $region37
    $region36: #{dqn_forward.1} parent=1 // pred_region
      %53 = dma.done [#allocation5], 1024
    $region37: #{dqn_forward.1} parent=1 // pred_fallthru
      _
    %v55 = vld [vmem:[%s1] sm:$0xf]
    %v56 = vld [vmem:[%s1 + $0x4] sm:$0xf]
    %v57 = vld [vmem:[#allocation2] sm:$0xf]
    %v58 = vld [vmem:[#allocation2 + $0x4] sm:$0xf]
    %v59 = vld [vmem:[#allocation2 + $0x8] sm:$0xf]
    %v60 = vld [vmem:[#allocation2 + $0xc] sm:$0xf]
    %v61 = vld [vmem:[#allocation2 + $0x10] sm:$0xf]
    %v62 = vld [vmem:[#allocation2 + $0x14] sm:$0xf]
    %v63 = vld [vmem:[#allocation2 + $0x18] sm:$0xf]
    %v64 = vld [vmem:[#allocation2 + $0x1c] sm:$0xf]
    %v65 = vld [vmem:[#allocation2 + $0x20] sm:$0xf]
    %v66 = vld [vmem:[#allocation2 + $0x24] sm:$0xf]
    %v67 = vld [vmem:[#allocation2 + $0x28] sm:$0xf]
    %v68 = vld [vmem:[#allocation2 + $0x2c] sm:$0xf]
    %v69 = vld [vmem:[#allocation2 + $0x30] sm:$0xf]
    %v70 = vld [vmem:[#allocation2 + $0x34] sm:$0xf]
    %v71 = vld [vmem:[#allocation2 + $0x38] sm:$0xf]
    %v72 = vld [vmem:[#allocation2 + $0x3c] sm:$0xf]
    %v73 = vld [vmem:[#allocation4] sm:$0xf]
    %v74 = vld [vmem:[#allocation4 + $0x4] sm:$0xf]
    %v75 = vld [vmem:[#allocation4 + $0x8] sm:$0xf]
    %v76 = vld [vmem:[#allocation4 + $0xc] sm:$0xf]
    %v77 = vld [vmem:[#allocation4 + $0x10] sm:$0xf]
    %v78 = vld [vmem:[#allocation4 + $0x14] sm:$0xf]
    %v79 = vld [vmem:[#allocation4 + $0x18] sm:$0xf]
    %v80 = vld [vmem:[#allocation4 + $0x1c] sm:$0xf]
    %v81 = vld [vmem:[#allocation4 + $0x20] sm:$0xf]
    %v82 = vld [vmem:[#allocation4 + $0x24] sm:$0xf]
    %v83 = vld [vmem:[#allocation4 + $0x28] sm:$0xf]
    %v84 = vld [vmem:[#allocation4 + $0x2c] sm:$0xf]
    %v85 = vld [vmem:[#allocation4 + $0x30] sm:$0xf]
    %v86 = vld [vmem:[#allocation4 + $0x34] sm:$0xf]
    %v87 = vld [vmem:[#allocation4 + $0x38] sm:$0xf]
    %v88 = vld [vmem:[#allocation4 + $0x3c] sm:$0xf]
    %v89 = vld [vmem:[%s2] sm:$0x1]
    %v90 = vld [vmem:[%s4] sm:$0x1]
    %v91 = vld [vmem:[%s6] sm:$0x1]
    %v92 = vld [vmem:[%s0] sm:$0xf]
    %v93 = vld [vmem:[%s0 + $0x4] sm:$0xf]
    %v95 = vlaneseq
    %v96 = vshrl.u32 %v95, 7
    %v97 = vsub.s32 0, %v96
    %v98 = vrot.slane %v89, %v97
    %v102 = vunpack.c.l.b16 %v92
    %v103 = vunpack.c.l.b16 %v93
    %v104 = vpack.c.b16 %v103, %v102
    %v107 = vunpack.c.l.b16 %v55
    %v108 = vunpack.c.l.b16 %v56
    %v109 = vpack.c.b16 %v108, %v107
    %vm111 = vcmask 130048
    %v113 = vsel %vm111, %v104, 0
    %115 = vmatprep.subr.bf16.mxu0 0
    %116 = vmatpush1.bf16.msra.mxu0 0
    %117 = vmatprep.subr.bf16.mxu0 0
    %118 = vmatpush1.bf16.msra.mxu0 0
    %119 = vmatprep.subr.bf16.mxu0 0
    %120 = vmatpush1.bf16.msra.mxu0 0
    %121 = vmatprep.subr.bf16.mxu0 0
    %122 = vmatpush1.bf16.msra.mxu0 0
    %123 = vmatprep.subr.bf16.mxu0 0
    %124 = vmatpush1.bf16.msra.mxu0 0
    %125 = vmatprep.subr.bf16.mxu0 0
    %126 = vmatpush1.bf16.msra.mxu0 0
    %127 = vmatprep.subr.bf16.mxu0 0
    %128 = vmatpush1.bf16.msra.mxu0 0
    %129 = vmatprep.subr.bf16.mxu0 0
    %130 = vmatpush1.bf16.msra.mxu0 %v109
    %131 = vmatprep.subr.bf16.mxu0 0
    %132 = vmatpush2.bf16.msra.mxu0 0
    %133 = vmatprep.subr.bf16.mxu0 0
    %134 = vmatpush2.bf16.msra.mxu0 0
    %135 = vmatprep.subr.bf16.mxu0 0
    %136 = vmatpush2.bf16.msra.mxu0 0
    %137 = vmatprep.subr.bf16.mxu0 0
    %138 = vmatpush2.bf16.msra.mxu0 0
    %139 = vmatprep.subr.bf16.mxu0 0
    %140 = vmatpush2.bf16.msra.mxu0 0
    %141 = vmatprep.subr.bf16.mxu0 0
    %142 = vmatpush2.bf16.msra.mxu0 0
    %143 = vmatprep.subr.bf16.mxu0 0
    %144 = vmatpush2.bf16.msra.mxu0 0
    %145 = vmatprep.subr.bf16.mxu0 0
    %146 = vmatpush2.bf16.msra.mxu0 0
    %147 = vmatprep.mubr.bf16.mxu0 0
    %148 = vmatmul.mubr.bf16.gmra.mxu0 %v113
    %v149 = vpop.f32.mrf.mxu0
    %v150 = vadd.f32 %v98, %v149
    %v151 = vpop.f32.mrf.mxu0
    %v152 = vpop.f32.mrf.mxu0
    %v153 = vadd.f32 %v98, %v152
    %v154 = vpop.f32.mrf.mxu0
    %155 = vdwg.mxu0
    %v156 = vmax.f32 %v150, 0.0
    %v157 = vmax.f32 %v153, 0.0
    %v158 = vpack.c.bf16 %v157, %v156
    %v160 = vlaneseq
    %v161 = vshrl.u32 %v160, 7
    %v162 = vsub.s32 0, %v161
    %v163 = vrot.slane %v90, %v162
    %v181 = vunpack.c.l.b16 %v57
    %v182 = vunpack.c.l.b16 %v58
    %v183 = vunpack.c.l.b16 %v59
    %v184 = vunpack.c.l.b16 %v60
    %v185 = vunpack.c.l.b16 %v61
    %v186 = vunpack.c.l.b16 %v62
    %v187 = vunpack.c.l.b16 %v63
    %v188 = vunpack.c.l.b16 %v64
    %v189 = vunpack.c.l.b16 %v65
    %v190 = vunpack.c.l.b16 %v66
    %v191 = vunpack.c.l.b16 %v67
    %v192 = vunpack.c.l.b16 %v68
    %v193 = vunpack.c.l.b16 %v69
    %v194 = vunpack.c.l.b16 %v70
    %v195 = vunpack.c.l.b16 %v71
    %v196 = vunpack.c.l.b16 %v72
    %v197 = vpack.c.b16 %v182, %v181
    %v198 = vpack.c.b16 %v184, %v183
    %v199 = vpack.c.b16 %v186, %v185
    %v200 = vpack.c.b16 %v188, %v187
    %v201 = vpack.c.b16 %v190, %v189
    %v202 = vpack.c.b16 %v192, %v191
    %v203 = vpack.c.b16 %v194, %v193
    %v204 = vpack.c.b16 %v196, %v195
    %213 = vmatprep.subr.bf16.mxu0 0
    %214 = vmatpush1.bf16.msra.mxu0 %v204
    %215 = vmatprep.subr.bf16.mxu0 0
    %216 = vmatpush1.bf16.msra.mxu0 %v203
    %217 = vmatprep.subr.bf16.mxu0 0
    %218 = vmatpush1.bf16.msra.mxu0 %v202
    %219 = vmatprep.subr.bf16.mxu0 0
    %220 = vmatpush1.bf16.msra.mxu0 %v201
    %221 = vmatprep.subr.bf16.mxu0 0
    %222 = vmatpush1.bf16.msra.mxu0 %v200
    %223 = vmatprep.subr.bf16.mxu0 0
    %224 = vmatpush1.bf16.msra.mxu0 %v199
    %225 = vmatprep.subr.bf16.mxu0 0
    %226 = vmatpush1.bf16.msra.mxu0 %v198
    %227 = vmatprep.subr.bf16.mxu0 0
    %228 = vmatpush1.bf16.msra.mxu0 %v197
    %229 = vmatprep.subr.bf16.mxu0 0
    %230 = vmatpush2.bf16.msra.mxu0 0
    %231 = vmatprep.subr.bf16.mxu0 0
    %232 = vmatpush2.bf16.msra.mxu0 0
    %233 = vmatprep.subr.bf16.mxu0 0
    %234 = vmatpush2.bf16.msra.mxu0 0
    %235 = vmatprep.subr.bf16.mxu0 0
    %236 = vmatpush2.bf16.msra.mxu0 0
    %237 = vmatprep.subr.bf16.mxu0 0
    %238 = vmatpush2.bf16.msra.mxu0 0
    %239 = vmatprep.subr.bf16.mxu0 0
    %240 = vmatpush2.bf16.msra.mxu0 0
    %241 = vmatprep.subr.bf16.mxu0 0
    %242 = vmatpush2.bf16.msra.mxu0 0
    %243 = vmatprep.subr.bf16.mxu0 0
    %244 = vmatpush2.bf16.msra.mxu0 0
    %245 = vmatprep.mubr.bf16.mxu0 0
    %246 = vmatmul.mubr.bf16.gmra.mxu0 %v158
    %v247 = vpop.f32.mrf.mxu0
    %v248 = vadd.f32 %v163, %v247
    %v249 = vpop.f32.mrf.mxu0
    %v250 = vpop.f32.mrf.mxu0
    %v251 = vadd.f32 %v163, %v250
    %v252 = vpop.f32.mrf.mxu0
    %253 = vdwg.mxu0
    %v254 = vmax.f32 %v248, 0.0
    %v255 = vmax.f32 %v251, 0.0
    %v256 = vpack.c.bf16 %v255, %v254
    %v258 = vlaneseq
    %v259 = vshrl.u32 %v258, 7
    %v260 = vsub.s32 0, %v259
    %v261 = vrot.slane %v91, %v260
    %v279 = vunpack.c.l.b16 %v73
    %v280 = vunpack.c.l.b16 %v74
    %v281 = vunpack.c.l.b16 %v75
    %v282 = vunpack.c.l.b16 %v76
    %v283 = vunpack.c.l.b16 %v77
    %v284 = vunpack.c.l.b16 %v78
    %v285 = vunpack.c.l.b16 %v79
    %v286 = vunpack.c.l.b16 %v80
    %v287 = vunpack.c.l.b16 %v81
    %v288 = vunpack.c.l.b16 %v82
    %v289 = vunpack.c.l.b16 %v83
    %v290 = vunpack.c.l.b16 %v84
    %v291 = vunpack.c.l.b16 %v85
    %v292 = vunpack.c.l.b16 %v86
    %v293 = vunpack.c.l.b16 %v87
    %v294 = vunpack.c.l.b16 %v88
    %v295 = vpack.c.b16 %v280, %v279
    %v296 = vpack.c.b16 %v282, %v281
    %v297 = vpack.c.b16 %v284, %v283
    %v298 = vpack.c.b16 %v286, %v285
    %v299 = vpack.c.b16 %v288, %v287
    %v300 = vpack.c.b16 %v290, %v289
    %v301 = vpack.c.b16 %v292, %v291
    %v302 = vpack.c.b16 %v294, %v293
    %311 = vmatprep.subr.bf16.mxu0 0
    %312 = vmatpush1.bf16.msra.mxu0 %v302
    %313 = vmatprep.subr.bf16.mxu0 0
    %314 = vmatpush1.bf16.msra.mxu0 %v301
    %315 = vmatprep.subr.bf16.mxu0 0
    %316 = vmatpush1.bf16.msra.mxu0 %v300
    %317 = vmatprep.subr.bf16.mxu0 0
    %318 = vmatpush1.bf16.msra.mxu0 %v299
    %319 = vmatprep.subr.bf16.mxu0 0
    %320 = vmatpush1.bf16.msra.mxu0 %v298
    %321 = vmatprep.subr.bf16.mxu0 0
    %322 = vmatpush1.bf16.msra.mxu0 %v297
    %323 = vmatprep.subr.bf16.mxu0 0
    %324 = vmatpush1.bf16.msra.mxu0 %v296
    %325 = vmatprep.subr.bf16.mxu0 0
    %326 = vmatpush1.bf16.msra.mxu0 %v295
    %327 = vmatprep.subr.bf16.mxu0 0
    %328 = vmatpush2.bf16.msra.mxu0 0
    %329 = vmatprep.subr.bf16.mxu0 0
    %330 = vmatpush2.bf16.msra.mxu0 0
    %331 = vmatprep.subr.bf16.mxu0 0
    %332 = vmatpush2.bf16.msra.mxu0 0
    %333 = vmatprep.subr.bf16.mxu0 0
    %334 = vmatpush2.bf16.msra.mxu0 0
    %335 = vmatprep.subr.bf16.mxu0 0
    %336 = vmatpush2.bf16.msra.mxu0 0
    %337 = vmatprep.subr.bf16.mxu0 0
    %338 = vmatpush2.bf16.msra.mxu0 0
    %339 = vmatprep.subr.bf16.mxu0 0
    %340 = vmatpush2.bf16.msra.mxu0 0
    %341 = vmatprep.subr.bf16.mxu0 0
    %342 = vmatpush2.bf16.msra.mxu0 0
    %343 = vmatprep.mubr.bf16.mxu0 0
    %344 = vmatmul.mubr.bf16.gmra.mxu0 %v256
    %v345 = vpop.f32.mrf.mxu0
    %v346 = vadd.f32 %v261, %v345
    %v347 = vpop.f32.mrf.mxu0
    %v348 = vpop.f32.mrf.mxu0
    %v349 = vadd.f32 %v261, %v348
    %v350 = vpop.f32.mrf.mxu0
    %351 = vdwg.mxu0
    %v352 = vpack.c.bf16 %v349, %v346
    %v354 = vunpack.c.l.b16 %v352
    %v355 = vunpack.c.h.b16 %v352
    %v356 = vpack.c.b16 %v354, %v354
    %v357 = vpack.c.b16 %v355, %v355
    %360 = vst [vmem:[%s7] sm:$0xf] %v356
    %361 = vst [vmem:[%s7 + $0x4] sm:$0xf] %v357
    // Predicated region
    $region38: #{dqn_forward.1} parent=1 // pred_check
      _
    $region39: #{dqn_forward.1} parent=1 // pred_check_branch
      %363 = sbr.rel (0) target = $region41
    $region40: #{dqn_forward.1} parent=1 // pred_region
      _
    $region41: #{dqn_forward.1} parent=1 // pred_fallthru
      _
    // Predicated region
    $region42: #{dqn_forward.1} parent=1 // pred_check
      _
    $region43: #{dqn_forward.1} parent=1 // pred_check_branch
      %365 = sbr.rel (0) target = $region45
    $region44: #{dqn_forward.1} parent=1 // pred_region
      _
    $region45: #{dqn_forward.1} parent=1 // pred_fallthru
      _
    %366 = vsyncpa [#allocation3], 1
    %367 = vsyncpa [#allocation5], 1

</llo_original>
